<compile_context>
chip_gen: v7x
topology: tpu7x:2x2x1
jax: 0.10.0
libtpu: 0.0.40
codegen_flags: <defaults>
</compile_context>

<pallas_src>
import functools
import math

import jax
import jax.numpy as jnp
from jax import lax
from jax.experimental import pallas as pl
from jax.experimental.pallas import tpu as pltpu


# ---------------------------------------------------------------------------
# Kernels
# ---------------------------------------------------------------------------

def _conv_kernel_single(x_ref, w_ref, o_ref, *, K, dilation, out_len):
    """Whole-sequence path (small out_len): one block per batch element.

    x_ref: (1, C_in, L)        unpadded input
    w_ref: (K, C_out, C_in)    full weight (resident across the grid)
    o_ref: (1, C_out, out_len)
    """
    pad = K - 1
    x = x_ref[0]                               # (C_in, L)
    c_in = x.shape[0]

    acc = None
    for k in range(K):                         # K is small & static -> unrolled
        s = k * dilation - pad                 # static shift: tap k reads x[t + s]
        if s <= -out_len:
            continue                           # tap only ever touches the zero pad
        if s < 0:
            win = jnp.concatenate(
                [jnp.zeros((c_in, -s), x.dtype), x[:, : out_len + s]], axis=1)
        else:
            win = x[:, s : s + out_len]        # s + out_len <= L always
        d = jnp.dot(w_ref[k], win, preferred_element_type=jnp.float32)
        acc = d if acc is None else acc + d
    o_ref[0] = acc.astype(o_ref.dtype)


def _tiled_body(xl_ref, xc_ref, xr_ref, w_ref, o_ref, *, K, dilation, TL, HL):
    """Length-tiled path.

    xl_ref: (1, C_in, HL)  lane-aligned block ending exactly at this tile's start
                           (left halo; zeroed on the first tile = causal pad)
    xc_ref: (1, C_in, TL)  current x tile
    xr_ref: (1, C_in, HR)  lane-aligned block starting at this tile's end
                           (right halo; only passed when dilation > 1), else None
    w_ref : (K, C_out, C_in)
    o_ref : (1, C_out, TL) (last tile partially written back by Pallas)
    """
    pad = K - 1
    lt = pl.program_id(1)
    cur = xc_ref[0]                                    # (C_in, TL)
    halo = xl_ref[0, :, HL - pad:]                     # (C_in, pad)
    # Causal left pad: zero the halo on the first length-tile.
    left = halo * (lt > 0).astype(halo.dtype)

    acc = None
    for k in range(K):
        s = k * dilation - pad                         # static, |s| < TL
        if s < 0:
            win = jnp.concatenate([left[:, pad + s:], cur[:, : TL + s]], axis=1)
        elif s == 0:
            win = cur
        else:                                          # only when dilation > 1
            win = jnp.concatenate([cur[:, s:], xr_ref[0, :, :s]], axis=1)
        d = jnp.dot(w_ref[k], win, preferred_element_type=jnp.float32)
        acc = d if acc is None else acc + d
    o_ref[0] = acc.astype(o_ref.dtype)


def _conv_kernel_tiled(xl_ref, xc_ref, xr_ref, w_ref, o_ref, *, K, dilation, TL, HL):
    _tiled_body(xl_ref, xc_ref, xr_ref, w_ref, o_ref,
                K=K, dilation=dilation, TL=TL, HL=HL)


def _conv_kernel_tiled_no_right(xl_ref, xc_ref, w_ref, o_ref, *, K, dilation, TL, HL):
    _tiled_body(xl_ref, xc_ref, None, w_ref, o_ref,
                K=K, dilation=dilation, TL=TL, HL=HL)


# ---------------------------------------------------------------------------
# Wrapper
# ---------------------------------------------------------------------------

def causal_conv1d(x, weight, *, dilation=1, block_len=1024):
    """Causal 1-D convolution (bias-free), matching CausalConv1d.forward.

    x:      (B, C_in, L)  NCW layout, like torch.nn.Conv1d
    weight: (C_out, C_in, K)
    Returns (B, C_out, L + (K-1)*(1 - dilation)).
    """
    B, C_in, L = x.shape
    C_out, C_in_w, K = weight.shape
    assert C_in == C_in_w
    # TODO(synk): K == 1 makes the PyTorch module slice `[..., :-0]` (empty tensor);
    # that degenerate case is not reproduced here.
    assert K >= 2 and dilation >= 1
    pad = K - 1
    rext = (K - 1) * (dilation - 1)        # rightwards reach of the taps
    out_len = L - rext                     # == L + (K-1)*(1 - dilation)
    assert out_len > 0

    w_kfirst = jnp.transpose(weight, (2, 0, 1))        # (K, C_out, C_in)
    w_block = (K, C_out, C_in)

    # --- tile-length selection (lane-dense, halo-aligned, VMEM-bounded) ------
    HL = 128 * pl.cdiv(pad, 128)                       # left-halo block width
    HR = 128 * pl.cdiv(rext, 128) if rext > 0 else 0   # right-halo block width
    align = HL if HR == 0 else math.lcm(HL, HR)
    vmem_budget = 8 * 1024 * 1024    # conservative: well under every generation's
                                     # default scoped VMEM (incl. v7x, 64 MiB phys)
    per_col = 2 * 4 * (C_in + C_out)  # f32, double-buffered in+out bytes / column
    tl = max(128, min(int(block_len), vmem_budget // per_col))
    TL = max(align, (tl // align) * align)

    if out_len <= TL:
        # Short sequences: one full block per batch element (block dims equal the
        # array dims, so the (8,128) rule is satisfied without padding).
        kernel = functools.partial(_conv_kernel_single, K=K, dilation=dilation,
                                   out_len=out_len)
        return pl.pallas_call(
            kernel,
            out_shape=jax.ShapeDtypeStruct((B, C_out, out_len), x.dtype),
            grid_spec=pltpu.PrefetchScalarGridSpec(
                num_scalar_prefetch=0,
                grid=(B,),
                in_specs=[
                    pl.BlockSpec((1, C_in, L), lambda b: (b, 0, 0)),
                    pl.BlockSpec(w_block, lambda b: (0, 0, 0)),
                ],
                out_specs=pl.BlockSpec((1, C_out, out_len), lambda b: (b, 0, 0)),
            ),
            compiler_params=pltpu.CompilerParams(
                dimension_semantics=("parallel",)),
        )(x, w_kfirst)

    # --- length-tiled path ----------------------------------------------------
    assert pad < TL and rext < TL
    n_tiles = pl.cdiv(out_len, TL)     # last tile may be partial (masked writeback)
    n_hl = TL // HL

    # Left halo: the HL-wide block that ends exactly where this tile starts
    # (clamped to block 0 and zeroed in-kernel for the first tile -> causal pad).
    left_spec = pl.BlockSpec(
        (1, C_in, HL), lambda b, t: (b, 0, jnp.maximum(t * n_hl - 1, 0)))
    cur_spec = pl.BlockSpec((1, C_in, TL), lambda b, t: (b, 0, t))
    w_spec = pl.BlockSpec(w_block, lambda b, t: (0, 0, 0))
    out_spec = pl.BlockSpec((1, C_out, TL), lambda b, t: (b, 0, t))

    if rext > 0:
        n_hr = TL // HR
        n_hr_blocks = pl.cdiv(L, HR)
        # Right halo: the HR-wide block starting at this tile's end (clamped; the
        # clamped case is only ever read for output columns that are sliced off).
        right_spec = pl.BlockSpec(
            (1, C_in, HR),
            lambda b, t: (b, 0, jnp.minimum((t + 1) * n_hr, n_hr_blocks - 1)))
        kernel = functools.partial(_conv_kernel_tiled, K=K, dilation=dilation,
                                   TL=TL, HL=HL)
        in_specs = [left_spec, cur_spec, right_spec, w_spec]
        args = (x, x, x, w_kfirst)
    else:
        kernel = functools.partial(_conv_kernel_tiled_no_right, K=K,
                                   dilation=dilation, TL=TL, HL=HL)
        in_specs = [left_spec, cur_spec, w_spec]
        args = (x, x, w_kfirst)

    return pl.pallas_call(
        kernel,
        out_shape=jax.ShapeDtypeStruct((B, C_out, out_len), x.dtype),
        grid_spec=pltpu.PrefetchScalarGridSpec(
            num_scalar_prefetch=0,
            grid=(B, n_tiles),
            in_specs=in_specs,
            out_specs=out_spec,
        ),
        compiler_params=pltpu.CompilerParams(
            # Both axes are independent -> both v7x TensorCores get shards.
            dimension_semantics=("parallel", "parallel")),
    )(*args)


# ---------------------------------------------------------------------------
# Reference + self-test
# ---------------------------------------------------------------------------

def _reference(x, weight, *, dilation=1):
    """Pure-JAX reference matching torch.nn.Conv1d + causal slice."""
    K = weight.shape[-1]
    pad = K - 1
    y = lax.conv_general_dilated(
        x, weight,
        window_strides=(1,),
        padding=[(pad, pad)],
        rhs_dilation=(dilation,),
        dimension_numbers=("NCH", "OIH", "NCH"),
        precision=lax.Precision.HIGHEST,
    )
    return y[:, :, :-pad]


if __name__ == "__main__":
    def run_case(kx, kw, *, B, C_in, C_out, L, K, dilation, block_len):
        x = jax.random.normal(kx, (B, C_in, L), dtype=jnp.float32)
        w = jax.random.normal(kw, (C_out, C_in, K), dtype=jnp.float32) * 0.1
        y = jax.block_until_ready(
            causal_conv1d(x, w, dilation=dilation, block_len=block_len))
        y_ref = _reference(x, w, dilation=dilation)
        assert y.shape == y_ref.shape, (y.shape, y_ref.shape)
        err = float(jnp.max(jnp.abs(y - y_ref)))
        assert err < 1e-4, err

    ks = jax.random.split(jax.random.PRNGKey(0), 8)

    # Module-sized case: in_channels=4, out_channels=8, kernel_size=3, dilation=1.
    run_case(ks[0], ks[1], B=2, C_in=4, C_out=8, L=16, K=3, dilation=1,
             block_len=1024)
    # Length-tiled path (dilation=1): left halo only, partial last tile.
    run_case(ks[2], ks[3], B=2, C_in=4, C_out=8, L=700, K=3, dilation=1,
             block_len=256)
    # Length-tiled path with dilation>1: left + right halos, partial last tile.
    run_case(ks[4], ks[5], B=1, C_in=4, C_out=8, L=500, K=3, dilation=3,
             block_len=128)
    # Short sequence with dilation>1 (single-block path).
    run_case(ks[6], ks[7], B=2, C_in=4, C_out=8, L=16, K=3, dilation=2,
             block_len=1024)

    print("KERNEL_OK")
</pallas_src>

<mosaic_0001>
module attributes {stable_mosaic.version = 11 : i64} {
  func.func @_conv_kernel_single(%arg0: i32, %arg1: memref<1x4x16xf32, #tpu.memory_space<vmem>>, %arg2: memref<3x8x4xf32, #tpu.memory_space<vmem>>, %arg3: memref<1x8x16xf32, #tpu.memory_space<vmem>>) attributes {dimension_semantics = [#tpu.dimension_semantics<parallel>], iteration_bounds = array<i64: 2>, scalar_prefetch = 0 : i64, scratch_operands = 0 : i64, tpu.core_type = #tpu.core_type<tc>, window_params = [{transform_indices = @transform_0, window_bounds = array<i64: 1, 4, 16>}, {pipeline_mode = #tpu.pipeline_mode<synchronous>, transform_indices = @transform_1, window_bounds = array<i64: 3, 8, 4>}, {transform_indices = @transform_2, window_bounds = array<i64: 1, 8, 16>}]} {
    %c0 = arith.constant 0 : index
    %c0_0 = arith.constant 0 : index
    %c0_1 = arith.constant 0 : index
    %0 = vector.load %arg1[%c0, %c0_0, %c0_1] : memref<1x4x16xf32, #tpu.memory_space<vmem>>, vector<1x4x16xf32>
    %1 = vector.shape_cast %0 : vector<1x4x16xf32> to vector<4x16xf32>
    %cst = arith.constant 0.000000e+00 : f32
    %2 = vector.broadcast %cst : f32 to vector<4x2xf32>
    %3 = vector.extract_strided_slice %1 {offsets = [0, 0], sizes = [4, 14], strides = [1, 1]} : vector<4x16xf32> to vector<4x14xf32>
    %4 = tpu.concatenate %2, %3 in 1 : vector<4x2xf32>, vector<4x14xf32> -> vector<4x16xf32>
    %c0_2 = arith.constant 0 : index
    %c0_3 = arith.constant 0 : index
    %c0_4 = arith.constant 0 : index
    %5 = vector.load %arg2[%c0_2, %c0_3, %c0_4] : memref<3x8x4xf32, #tpu.memory_space<vmem>>, vector<1x8x4xf32>
    %6 = vector.shape_cast %5 : vector<1x8x4xf32> to vector<8x4xf32>
    %cst_5 = arith.constant dense<0.000000e+00> : vector<8x16xf32>
    %7 = tpu.matmul %6, %4, %cst_5 {dimension_numbers = #tpu.dot_dimension_numbers<[1], [0], [0], [1], [0, 0, 1, 1], [], []>} : vector<8x4xf32>, vector<4x16xf32>, vector<8x16xf32> -> vector<8x16xf32>
    %cst_6 = arith.constant 0.000000e+00 : f32
    %8 = vector.broadcast %cst_6 : f32 to vector<4x1xf32>
    %9 = vector.extract_strided_slice %1 {offsets = [0, 0], sizes = [4, 15], strides = [1, 1]} : vector<4x16xf32> to vector<4x15xf32>
    %10 = tpu.concatenate %8, %9 in 1 : vector<4x1xf32>, vector<4x15xf32> -> vector<4x16xf32>
    %c1 = arith.constant 1 : index
    %c0_7 = arith.constant 0 : index
    %c0_8 = arith.constant 0 : index
    %11 = vector.load %arg2[%c1, %c0_7, %c0_8] : memref<3x8x4xf32, #tpu.memory_space<vmem>>, vector<1x8x4xf32>
    %12 = vector.shape_cast %11 : vector<1x8x4xf32> to vector<8x4xf32>
    %cst_9 = arith.constant dense<0.000000e+00> : vector<8x16xf32>
    %13 = tpu.matmul %12, %10, %cst_9 {dimension_numbers = #tpu.dot_dimension_numbers<[1], [0], [0], [1], [0, 0, 1, 1], [], []>} : vector<8x4xf32>, vector<4x16xf32>, vector<8x16xf32> -> vector<8x16xf32>
    %14 = arith.addf %7, %13 : vector<8x16xf32>
    %c2 = arith.constant 2 : index
    %c0_10 = arith.constant 0 : index
    %c0_11 = arith.constant 0 : index
    %15 = vector.load %arg2[%c2, %c0_10, %c0_11] : memref<3x8x4xf32, #tpu.memory_space<vmem>>, vector<1x8x4xf32>
    %16 = vector.shape_cast %15 : vector<1x8x4xf32> to vector<8x4xf32>
    %cst_12 = arith.constant dense<0.000000e+00> : vector<8x16xf32>
    %17 = tpu.matmul %16, %1, %cst_12 {dimension_numbers = #tpu.dot_dimension_numbers<[1], [0], [0], [1], [0, 0, 1, 1], [], []>} : vector<8x4xf32>, vector<4x16xf32>, vector<8x16xf32> -> vector<8x16xf32>
    %18 = arith.addf %14, %17 : vector<8x16xf32>
    %c0_13 = arith.constant 0 : index
    %c0_14 = arith.constant 0 : index
    %c0_15 = arith.constant 0 : index
    %19 = vector.load %arg3[%c0_13, %c0_14, %c0_15] : memref<1x8x16xf32, #tpu.memory_space<vmem>>, vector<1x8x16xf32>
    %20 = vector.shape_cast %19 : vector<1x8x16xf32> to vector<8x16xf32>
    %21 = vector.shape_cast %18 : vector<8x16xf32> to vector<1x8x16xf32>
    tpu.vector_store %arg3[%c0_13, %c0_14, %c0_15], %21 {strides = array<i32>} : memref<1x8x16xf32, #tpu.memory_space<vmem>>, vector<1x8x16xf32>,
    return
  }
  func.func @transform_0(%arg0: i32) -> (i32, i32, i32) {
    %c0_i32 = arith.constant 0 : i32
    %c0_i32_0 = arith.constant 0 : i32
    %c0_i32_1 = arith.constant 0 : i32
    return %arg0, %c0_i32, %c0_i32_0 : i32, i32, i32
  }
  func.func @transform_1(%arg0: i32) -> (i32, i32, i32) {
    %c0_i32 = arith.constant 0 : i32
    %c0_i32_0 = arith.constant 0 : i32
    %c0_i32_1 = arith.constant 0 : i32
    %c0_i32_2 = arith.constant 0 : i32
    return %c0_i32, %c0_i32_0, %c0_i32_1 : i32, i32, i32
  }
  func.func @transform_2(%arg0: i32) -> (i32, i32, i32) {
    %c0_i32 = arith.constant 0 : i32
    %c0_i32_0 = arith.constant 0 : i32
    %c0_i32_1 = arith.constant 0 : i32
    return %arg0, %c0_i32, %c0_i32_0 : i32, i32, i32
  }
}

</mosaic_0001>

<llo_original>
// kernel: tpu_custom_call.1
$region0: #{tpu_custom_call.1}
  #allocation0 [shape = 'u32[]', space=smem, size = 0x4, offset = 0x4, fixed_abs, tag = 'smem constant byte address 0x4 - core index']
  #allocation1 [shape = 'u32[144,128]{1,0:T(1,128)}', space=vmem, size = 0x12000, scoped, tag = 'internal scratch']
  %s0 = inlined_call_operand.vmem [shape: f32[2,4,16], index: 0, kind: input, shape index: {}]
  %s1 = inlined_call_operand.vmem [shape: f32[3,8,4], index: 1, kind: input, shape index: {}]
  %s2 = inlined_call_operand.hbm [shape: f32[2,8,16], index: 2, kind: output, shape index: {}]
  %s3 = sld [smem:[#allocation0]]
  $region41: #{tpu_custom_call.1} parent=0
    _
  %s5 = ssub.s32 1, %s3
  %s6 = scalar_select 0, %s5, %s3
  $region1: #{tpu_custom_call.1} parent=0
    #allocation2 [shape = 'u8[8192]{0}', space=vmem, size = 0x2000, scoped, tag = 'output window, operand 0']
    #allocation3 [shape = 's32[2]{0}', space=sflag, size = 0x8, scoped, tag = 'scoped memory for tpu_custom_call.1']
    %7 = vsyncpa [#allocation3], 0
    %s8 = scalar_lea.sflag [#allocation3], 1
    %9 = vsyncpa %s8, 0
    loop: start=0, step=1, limit=4
    $region2: #{tpu_custom_call.1} parent=1 // loop_pre_header
      _
    $region3: #{tpu_custom_call.1} parent=1 // loop_header
      %s11 = sphi 0, %s15
      %p12 = scmp.ge.s32.totalorder %s11, 4
      %s21 = sphi 0, %s23
      %s24 = sphi 0, %s21
      %s25 = sphi 0, %s24
      %s41 = sphi 0, %s25
      %s45 = sphi 0, %s45
      %s47 = sphi 0, %s45
      %s48 = sphi 0, %s47
      %s62 = sphi 0, %s48
      %s68 = sphi 0, %s70
      %s71 = sphi 0, %s68
      %s72 = sphi 0, %s71
      %s88 = sphi 0, %s72
    $region4: #{tpu_custom_call.1} parent=1 // loop_header_branch
      %14 = sbr.rel (%p12) target = $region8
    $region5: #{tpu_custom_call.1} parent=1 // loop_body
      %s16 = ssub.s32 %s11, 1
      %s17 = ssub.s32 %s11, 2
      %s18 = sadd.s32 %s11, 1
      %s19 = ssub.s32 %s11, %s18
      %p20 = scmp.eq.s32.totalorder %s19, 0
      %s22 = sadd.s32 %s21, 1
      %s23 = scalar_select %p20, %s21, %s22
      %p26 = pneg %p20
      %p27 = scmp.eq.s32.totalorder %s11, 1
      %p28 = por %p26, %p27
      %p29 = scmp.ne.s32.totalorder %s21, %s24
      %p30 = scmp.eq.s32.totalorder %s11, 0
      %p31 = por %p29, %p30
      %p32 = scmp.ne.s32.totalorder %s21, %s24
      %p33 = scmp.eq.s32.totalorder %s16, 1
      %p34 = por %p32, %p33
      %p35 = scmp.ne.s32.totalorder %s24, %s25
      %p36 = scmp.eq.s32.totalorder %s16, 0
      %p37 = por %p35, %p36
      %p38 = scmp.ne.s32.totalorder %s24, %s25
      %p39 = scmp.eq.s32.totalorder %s17, 1
      %p40 = por %p38, %p39
      %p42 = scmp.ne.s32.totalorder %s25, %s41
      %p43 = scmp.eq.s32.totalorder %s17, 0
      %p44 = por %p42, %p43
      %s46 = sadd.s32 %s45, 1
      %p49 = scmp.eq.s32.totalorder %s11, 1
      %p50 = scmp.ne.s32.totalorder %s45, %s47
      %p51 = scmp.eq.s32.totalorder %s11, 0
      %p52 = por %p50, %p51
      %p53 = scmp.ne.s32.totalorder %s45, %s47
      %p54 = scmp.eq.s32.totalorder %s16, 1
      %p55 = por %p53, %p54
      %p56 = scmp.ne.s32.totalorder %s47, %s48
      %p57 = scmp.eq.s32.totalorder %s16, 0
      %p58 = por %p56, %p57
      %p59 = scmp.ne.s32.totalorder %s47, %s48
      %p60 = scmp.eq.s32.totalorder %s17, 1
      %p61 = por %p59, %p60
      %p63 = scmp.ne.s32.totalorder %s48, %s62
      %p64 = scmp.eq.s32.totalorder %s17, 0
      %p65 = por %p63, %p64
      %s66 = ssub.s32 %s11, %s18
      %p67 = scmp.eq.s32.totalorder %s66, 0
      %s69 = sadd.s32 %s68, 1
      %s70 = scalar_select %p67, %s68, %s69
      %p73 = pneg %p67
      %p74 = scmp.eq.s32.totalorder %s11, 1
      %p75 = por %p73, %p74
      %p76 = scmp.ne.s32.totalorder %s68, %s71
      %p77 = scmp.eq.s32.totalorder %s11, 0
      %p78 = por %p76, %p77
      %p79 = scmp.ne.s32.totalorder %s68, %s71
      %p80 = scmp.eq.s32.totalorder %s16, 1
      %p81 = por %p79, %p80
      %p82 = scmp.ne.s32.totalorder %s71, %s72
      %p83 = scmp.eq.s32.totalorder %s16, 0
      %p84 = por %p82, %p83
      %p85 = scmp.ne.s32.totalorder %s71, %s72
      %p86 = scmp.eq.s32.totalorder %s17, 1
      %p87 = por %p85, %p86
      %p89 = scmp.ne.s32.totalorder %s72, %s88
      %p90 = scmp.eq.s32.totalorder %s17, 0
      %p91 = por %p89, %p90
      %p92 = scmp.le.s32.totalorder 1, %s11
      %p93 = scmp.lt.s32.totalorder %s11, 3
      %p94 = pnand %p92, %p93
      %p95 = pneg %p94
      // Predicated region
      $region9: #{tpu_custom_call.1} parent=5 // pred_check
        _
      $region10: #{tpu_custom_call.1} parent=5 // pred_check_branch
        %97 = sbr.rel (%p94) target = $region12
      $region11: #{tpu_custom_call.1} parent=5 // pred_region
        %s98 = ssub.s32 %s11, 1
        // Predicated region
        $region13: #{tpu_custom_call.1} parent=11 // pred_check
          %p99 = pneg %p58
        $region14: #{tpu_custom_call.1} parent=11 // pred_check_branch
          %101 = sbr.rel (%p99) target = $region16
        $region15: #{tpu_custom_call.1} parent=11 // pred_region
          _
        $region16: #{tpu_custom_call.1} parent=11 // pred_fallthru
          _
      $region12: #{tpu_custom_call.1} parent=5 // pred_fallthru
        _
      %p102 = scmp.lt.s32.totalorder %s11, 2
      // Predicated region
      $region17: #{tpu_custom_call.1} parent=5 // pred_check
        %p103 = pneg %p102
      $region18: #{tpu_custom_call.1} parent=5 // pred_check_branch
        %105 = sbr.rel (%p103) target = $region20
      $region19: #{tpu_custom_call.1} parent=5 // pred_region
        // Predicated region
        $region21: #{tpu_custom_call.1} parent=19 // pred_check
          %p106 = pneg %p31
        $region22: #{tpu_custom_call.1} parent=19 // pred_check_branch
          %108 = sbr.rel (%p106) target = $region24
        $region23: #{tpu_custom_call.1} parent=19 // pred_region
          %p109 = scmp.lt.s32.totalorder %s11, 1
          %s110 = scalar_select %p109, %s11, 1
          %s111 = smul.addr %s110, 4
          %s112 = scalar_lea.vmem %s0, %s111
        $region24: #{tpu_custom_call.1} parent=19 // pred_fallthru
          _
      $region20: #{tpu_custom_call.1} parent=5 // pred_fallthru
        _
      %p113 = scmp.le.s32.totalorder 1, %s11
      %p114 = scmp.lt.s32.totalorder %s11, 3
      %p115 = pnand %p113, %p114
      %p116 = pneg %p115
      // Predicated region
      $region25: #{tpu_custom_call.1} parent=5 // pred_check
        _
      $region26: #{tpu_custom_call.1} parent=5 // pred_check_branch
        %118 = sbr.rel (%p115) target = $region28
      $region27: #{tpu_custom_call.1} parent=5 // pred_region
        %s119 = ssub.s32 %s11, 1
        %p120 = scmp.lt.s32.totalorder %s16, 1
        %s121 = scalar_select %p120, %s16, 1
        %s122 = smul.addr %s121, 4
        %s123 = scalar_lea.vmem %s0, %s122
        %p124 = pneg %p37
        %p125 = pneg %p34
        %p126 = pneg %p58
        %p127 = pneg %p55
        %p128 = pneg %p84
        %p129 = pneg %p81
        %s130 = sand.u32 %s71, 1
        %s131 = scalar_lea.sflag [#allocation3], %s130
        %s132 = sand.u32 %s71, 1
        %s133 = smul.addr %s132, 8
        %s134 = scalar_lea.vmem [#allocation2], %s133
        %p135 = scmp.lt.s32.totalorder %s16, 1
        %s136 = scalar_select %p135, %s16, 1
        %s137 = smul.addr %s136, 4
        %s138 = scalar_lea.vmem %s0, %s137
        %v139 = vld [vmem:[%s138] sm:$0xf]
        %141 = vrot.lane.b32.xlu0 %v139, 2
        %v142 = vpop.permute.xlu0 %141
        %vm144 = vcmask 15360
        %v145 = vsel %vm144, 0.0, %v142
        %v146 = vld [vmem:[%s1] sm:$0xff]
        %147 = vrot.lane.b32.xlu0 %v139, 1
        %v148 = vpop.permute.xlu0 %147
        %vm150 = vcmask 7168
        %v151 = vsel %vm150, 0.0, %v148
        %s152 = scalar_lea.vmem %s1, 8
        %v153 = vld [vmem:[%s152] sm:$0xff]
        %vm154 = vcmask 31744
        %v156 = vsel %vm154, %v153, 0
        %vm158 = vcmask 1043456
        %v160 = vsel %vm158, %v151, 0
        %162 = vmatprep.subr.mxu0 0.0
        %163 = vmatpush1.msra.mxu0 %v160
        %164 = vmatprep.subr.mxu0 0.0
        %165 = vmatpush1.msra.mxu0 0.0
        %166 = vmatprep.subr.mxu0 0.0
        %167 = vmatpush1.msra.mxu0 0.0
        %168 = vmatprep.subr.mxu0 0.0
        %169 = vmatpush1.msra.mxu0 0.0
        %170 = vmatprep.subr.mxu0 0.0
        %171 = vmatpush1.msra.mxu0 0.0
        %172 = vmatprep.subr.mxu0 0.0
        %173 = vmatpush1.msra.mxu0 0.0
        %174 = vmatprep.subr.mxu0 0.0
        %175 = vmatpush1.msra.mxu0 0.0
        %176 = vmatprep.subr.mxu0 0.0
        %177 = vmatpush1.msra.mxu0 0.0
        %178 = vmatprep.subr.mxu0 0.0
        %179 = vmatpush1.msra.mxu0 0.0
        %180 = vmatprep.subr.mxu0 0.0
        %181 = vmatpush1.msra.mxu0 0.0
        %182 = vmatprep.subr.mxu0 0.0
        %183 = vmatpush1.msra.mxu0 0.0
        %184 = vmatprep.subr.mxu0 0.0
        %185 = vmatpush1.msra.mxu0 0.0
        %186 = vmatprep.subr.mxu0 0.0
        %187 = vmatpush1.msra.mxu0 0.0
        %188 = vmatprep.subr.mxu0 0.0
        %189 = vmatpush1.msra.mxu0 0.0
        %190 = vmatprep.subr.mxu0 0.0
        %191 = vmatpush1.msra.mxu0 0.0
        %192 = vmatprep.subr.mxu0 0.0
        %193 = vmatpush1.msra.mxu0 0.0
        %194 = vmatprep.subr.mxu0 0.0
        %195 = vmatpush1.msra.mxu0 0.0
        %196 = vmatprep.subr.mxu0 0.0
        %197 = vmatpush1.msra.mxu0 0.0
        %198 = vmatprep.subr.mxu0 0.0
        %199 = vmatpush1.msra.mxu0 0.0
        %200 = vmatprep.subr.mxu0 0.0
        %201 = vmatpush1.msra.mxu0 0.0
        %202 = vmatprep.subr.mxu0 0.0
        %203 = vmatpush1.msra.mxu0 0.0
        %204 = vmatprep.subr.mxu0 0.0
        %205 = vmatpush1.msra.mxu0 0.0
        %206 = vmatprep.subr.mxu0 0.0
        %207 = vmatpush1.msra.mxu0 0.0
        %208 = vmatprep.subr.mxu0 0.0
        %209 = vmatpush1.msra.mxu0 0.0
        %210 = vmatprep.subr.mxu0 0.0
        %211 = vmatpush1.msra.mxu0 0.0
        %212 = vmatprep.subr.mxu0 0.0
        %213 = vmatpush1.msra.mxu0 0.0
        %214 = vmatprep.subr.mxu0 0.0
        %215 = vmatpush1.msra.mxu0 0.0
        %216 = vmatprep.subr.mxu0 0.0
        %217 = vmatpush1.msra.mxu0 0.0
        %218 = vmatprep.subr.mxu0 0.0
        %219 = vmatpush1.msra.mxu0 0.0
        %220 = vmatprep.subr.mxu0 0.0
        %221 = vmatpush1.msra.mxu0 0.0
        %222 = vmatprep.subr.mxu0 0.0
        %223 = vmatpush1.msra.mxu0 0.0
        %224 = vmatprep.subr.mxu0 0.0
        %225 = vmatpush1.msra.mxu0 0.0
        %226 = vmatprep.mubr.f32.mxu0 0.0
        %227 = vmatmul.mubr.f32.gmra.mrb[0].mxu0 %v156
        %v228 = vpop.f32.mrb[0].mxu0
        %v229 = vadd.f32 0.0, %v228
        %v230 = vpop.f32.mrb[0].mxu0
        %231 = vdwg.mxu0
        %v233 = vsel %vm154, %v146, 0
        %v236 = vsel %vm158, %v145, 0
        %238 = vmatprep.subr.mxu0 0.0
        %239 = vmatpush1.msra.mxu0 %v236
        %240 = vmatprep.subr.mxu0 0.0
        %241 = vmatpush1.msra.mxu0 0.0
        %242 = vmatprep.subr.mxu0 0.0
        %243 = vmatpush1.msra.mxu0 0.0
        %244 = vmatprep.subr.mxu0 0.0
        %245 = vmatpush1.msra.mxu0 0.0
        %246 = vmatprep.subr.mxu0 0.0
        %247 = vmatpush1.msra.mxu0 0.0
        %248 = vmatprep.subr.mxu0 0.0
        %249 = vmatpush1.msra.mxu0 0.0
        %250 = vmatprep.subr.mxu0 0.0
        %251 = vmatpush1.msra.mxu0 0.0
        %252 = vmatprep.subr.mxu0 0.0
        %253 = vmatpush1.msra.mxu0 0.0
        %254 = vmatprep.subr.mxu0 0.0
        %255 = vmatpush1.msra.mxu0 0.0
        %256 = vmatprep.subr.mxu0 0.0
        %257 = vmatpush1.msra.mxu0 0.0
        %258 = vmatprep.subr.mxu0 0.0
        %259 = vmatpush1.msra.mxu0 0.0
        %260 = vmatprep.subr.mxu0 0.0
        %261 = vmatpush1.msra.mxu0 0.0
        %262 = vmatprep.subr.mxu0 0.0
        %263 = vmatpush1.msra.mxu0 0.0
        %264 = vmatprep.subr.mxu0 0.0
        %265 = vmatpush1.msra.mxu0 0.0
        %266 = vmatprep.subr.mxu0 0.0
        %267 = vmatpush1.msra.mxu0 0.0
        %268 = vmatprep.subr.mxu0 0.0
        %269 = vmatpush1.msra.mxu0 0.0
        %270 = vmatprep.subr.mxu0 0.0
        %271 = vmatpush1.msra.mxu0 0.0
        %272 = vmatprep.subr.mxu0 0.0
        %273 = vmatpush1.msra.mxu0 0.0
        %274 = vmatprep.subr.mxu0 0.0
        %275 = vmatpush1.msra.mxu0 0.0
        %276 = vmatprep.subr.mxu0 0.0
        %277 = vmatpush1.msra.mxu0 0.0
        %278 = vmatprep.subr.mxu0 0.0
        %279 = vmatpush1.msra.mxu0 0.0
        %280 = vmatprep.subr.mxu0 0.0
        %281 = vmatpush1.msra.mxu0 0.0
        %282 = vmatprep.subr.mxu0 0.0
        %283 = vmatpush1.msra.mxu0 0.0
        %284 = vmatprep.subr.mxu0 0.0
        %285 = vmatpush1.msra.mxu0 0.0
        %286 = vmatprep.subr.mxu0 0.0
        %287 = vmatpush1.msra.mxu0 0.0
        %288 = vmatprep.subr.mxu0 0.0
        %289 = vmatpush1.msra.mxu0 0.0
        %290 = vmatprep.subr.mxu0 0.0
        %291 = vmatpush1.msra.mxu0 0.0
        %292 = vmatprep.subr.mxu0 0.0
        %293 = vmatpush1.msra.mxu0 0.0
        %294 = vmatprep.subr.mxu0 0.0
        %295 = vmatpush1.msra.mxu0 0.0
        %296 = vmatprep.subr.mxu0 0.0
        %297 = vmatpush1.msra.mxu0 0.0
        %298 = vmatprep.subr.mxu0 0.0
        %299 = vmatpush1.msra.mxu0 0.0
        %300 = vmatprep.subr.mxu0 0.0
        %301 = vmatpush1.msra.mxu0 0.0
        %302 = vmatprep.mubr.f32.mxu0 0.0
        %303 = vmatmul.mubr.f32.gmra.mrb[0].mxu0 %v233
        %v304 = vpop.f32.mrb[0].mxu0
        %v305 = vadd.f32 %v229, %v304
        %v306 = vpop.f32.mrb[0].mxu0
        %307 = vdwg.mxu0
        %s308 = scalar_lea.vmem %s1, 16
        %v309 = vld [vmem:[%s308] sm:$0xff]
        %v311 = vsel %vm154, %v309, 0
        %v313 = vsel %vm158, %v139, 0
        %315 = vmatprep.subr.mxu0 0.0
        %316 = vmatpush1.msra.mxu0 %v313
        %317 = vmatprep.subr.mxu0 0.0
        %318 = vmatpush1.msra.mxu0 0.0
        %319 = vmatprep.subr.mxu0 0.0
        %320 = vmatpush1.msra.mxu0 0.0
        %321 = vmatprep.subr.mxu0 0.0
        %322 = vmatpush1.msra.mxu0 0.0
        %323 = vmatprep.subr.mxu0 0.0
        %324 = vmatpush1.msra.mxu0 0.0
        %325 = vmatprep.subr.mxu0 0.0
        %326 = vmatpush1.msra.mxu0 0.0
        %327 = vmatprep.subr.mxu0 0.0
        %328 = vmatpush1.msra.mxu0 0.0
        %329 = vmatprep.subr.mxu0 0.0
        %330 = vmatpush1.msra.mxu0 0.0
        %331 = vmatprep.subr.mxu0 0.0
        %332 = vmatpush1.msra.mxu0 0.0
        %333 = vmatprep.subr.mxu0 0.0
        %334 = vmatpush1.msra.mxu0 0.0
        %335 = vmatprep.subr.mxu0 0.0
        %336 = vmatpush1.msra.mxu0 0.0
        %337 = vmatprep.subr.mxu0 0.0
        %338 = vmatpush1.msra.mxu0 0.0
        %339 = vmatprep.subr.mxu0 0.0
        %340 = vmatpush1.msra.mxu0 0.0
        %341 = vmatprep.subr.mxu0 0.0
        %342 = vmatpush1.msra.mxu0 0.0
        %343 = vmatprep.subr.mxu0 0.0
        %344 = vmatpush1.msra.mxu0 0.0
        %345 = vmatprep.subr.mxu0 0.0
        %346 = vmatpush1.msra.mxu0 0.0
        %347 = vmatprep.subr.mxu0 0.0
        %348 = vmatpush1.msra.mxu0 0.0
        %349 = vmatprep.subr.mxu0 0.0
        %350 = vmatpush1.msra.mxu0 0.0
        %351 = vmatprep.subr.mxu0 0.0
        %352 = vmatpush1.msra.mxu0 0.0
        %353 = vmatprep.subr.mxu0 0.0
        %354 = vmatpush1.msra.mxu0 0.0
        %355 = vmatprep.subr.mxu0 0.0
        %356 = vmatpush1.msra.mxu0 0.0
        %357 = vmatprep.subr.mxu0 0.0
        %358 = vmatpush1.msra.mxu0 0.0
        %359 = vmatprep.subr.mxu0 0.0
        %360 = vmatpush1.msra.mxu0 0.0
        %361 = vmatprep.subr.mxu0 0.0
        %362 = vmatpush1.msra.mxu0 0.0
        %363 = vmatprep.subr.mxu0 0.0
        %364 = vmatpush1.msra.mxu0 0.0
        %365 = vmatprep.subr.mxu0 0.0
        %366 = vmatpush1.msra.mxu0 0.0
        %367 = vmatprep.subr.mxu0 0.0
        %368 = vmatpush1.msra.mxu0 0.0
        %369 = vmatprep.subr.mxu0 0.0
        %370 = vmatpush1.msra.mxu0 0.0
        %371 = vmatprep.subr.mxu0 0.0
        %372 = vmatpush1.msra.mxu0 0.0
        %373 = vmatprep.subr.mxu0 0.0
        %374 = vmatpush1.msra.mxu0 0.0
        %375 = vmatprep.subr.mxu0 0.0
        %376 = vmatpush1.msra.mxu0 0.0
        %377 = vmatprep.subr.mxu0 0.0
        %378 = vmatpush1.msra.mxu0 0.0
        %379 = vmatprep.mubr.f32.mxu0 0.0
        %380 = vmatmul.mubr.f32.gmra.mrb[0].mxu0 %v311
        %v381 = vpop.f32.mrb[0].mxu0
        %v382 = vadd.f32 0.0, %v381
        %v383 = vpop.f32.mrb[0].mxu0
        %384 = vdwg.mxu0
        %v385 = vadd.f32 %v305, %v382
        %vm386 = vcmask 130048
        %387 = vst.msk [vmem:[%s134] sm:$0xff] %vm386, %v385
        %s388 = sand.u32 %s71, 1
        %s389 = scalar_lea.sflag [#allocation3], %s388
        %s390 = sand.u32 %s71, 1
        %s391 = smul.addr %s390, 8
        %s392 = scalar_lea.vmem [#allocation2], %s391
        // Predicated region
        $region29: #{tpu_custom_call.1} parent=27 // pred_check
          %p393 = pneg %p81
        $region30: #{tpu_custom_call.1} parent=27 // pred_check_branch
          %395 = sbr.rel (%p393) target = $region32
        $region31: #{tpu_custom_call.1} parent=27 // pred_region
          %s397 = ssub.s32 128, 128
          %398 = vsyncadd %s389, %s397
          %s399 = smul.addr %s16, 128
          %s400 = scalar_lea.hbm %s2, %s399
          %s402 = sshll.u32 %s392, 4
          %s403 = int_to_ptr.vmem [resolvable:$true] %s402
          %405 = dma.vmem_to_hbm [thread:$0]  %s403, 128, %s400, %s389
        $region32: #{tpu_custom_call.1} parent=27 // pred_fallthru
          _
      $region28: #{tpu_custom_call.1} parent=5 // pred_fallthru
        _
      %p406 = scmp.le.s32.totalorder 2, %s11
      // Predicated region
      $region33: #{tpu_custom_call.1} parent=5 // pred_check
        %p407 = pneg %p406
      $region34: #{tpu_custom_call.1} parent=5 // pred_check_branch
        %409 = sbr.rel (%p407) target = $region36
      $region35: #{tpu_custom_call.1} parent=5 // pred_region
        %s410 = ssub.s32 %s11, 2
        // Predicated region
        $region37: #{tpu_custom_call.1} parent=35 // pred_check
          %p411 = pneg %p87
        $region38: #{tpu_custom_call.1} parent=35 // pred_check_branch
          %413 = sbr.rel (%p411) target = $region40
        $region39: #{tpu_custom_call.1} parent=35 // pred_region
          %s414 = sand.u32 %s72, 1
          %s415 = scalar_lea.sflag [#allocation3], %s414
          %s416 = sand.u32 %s72, 1
          %s417 = smul.addr %s416, 8
          %s418 = scalar_lea.vmem [#allocation2], %s417
          %419 = dma.done %s415, 128
        $region40: #{tpu_custom_call.1} parent=35 // pred_fallthru
          _
      $region36: #{tpu_custom_call.1} parent=5 // pred_fallthru
        _
    $region6: #{tpu_custom_call.1} parent=1 // loop_footer
      %s15 = sadd.s32 1, %s11
    $region7: #{tpu_custom_call.1} parent=1 // loop_footer_branch
      %10 = sbr.rel target = $region3
    $region8: #{tpu_custom_call.1} parent=1 // loop_exit
      _
    %420 = vsyncpa [#allocation3], 1
    %s421 = scalar_lea.sflag [#allocation3], 1
    %422 = vsyncpa %s421, 1

</llo_original>
